<compile_context>
chip_gen: v7x
topology: tpu7x:2x2x1
jax: 0.10.0
libtpu: 0.0.40
codegen_flags: <defaults>
</compile_context>

<pallas_src>
import functools

import jax
import jax.numpy as jnp
from jax.experimental import pallas as pl
from jax.experimental.pallas import tpu as pltpu


def _sum_kernel(x_ref, o_ref, acc_ref, *, n_total, tn, mask_last):
    """Accumulate one (1, TN, D) tile of x into a resident f32 accumulator."""
    k = pl.program_id(1)

    @pl.when(k == 0)
    def _init():
        acc_ref[...] = jnp.zeros_like(acc_ref)

    x = x_ref[...].astype(jnp.float32)  # (1, TN, D); f32 accumulation

    if mask_last:
        # Zero out rows past the true N on the (possibly ragged) last tile.
        row = jax.lax.broadcasted_iota(jnp.int32, x.shape, 1)
        x = jnp.where(k * tn + row < n_total, x, 0.0)

    acc_ref[...] += jnp.sum(x, axis=1, keepdims=True)  # (1, 1, D)

    @pl.when(k == pl.num_programs(1) - 1)
    def _finalize():
        o_ref[...] = acc_ref[...].astype(o_ref.dtype)


def _choose_tn(n: int, d: int, itemsize: int, target_tile_bytes: int) -> int:
    """Pick a reduction-tile length: ~target_tile_bytes per input buffer,
    a multiple of 8 (sublane granularity), and conservative enough that
    2 double-buffered inputs + accumulator fit every generation's VMEM."""
    rows = target_tile_bytes // max(1, d * itemsize)
    rows = max(8, (rows // 8) * 8)
    return rows


def sum_dim1_keepdim(x: jax.Array, *, target_tile_bytes: int = 4 * 1024 * 1024) -> jax.Array:
    """Equivalent of torch Sum(dim=1): x.sum(dim=1, keepdim=True) for x of shape [B, N, D]."""
    B, N, D = x.shape
    itemsize = jnp.dtype(x.dtype).itemsize

    rows = _choose_tn(N, D, itemsize, target_tile_bytes)
    if N <= rows:
        tn = N                    # full reduction dim fits in one tile
        num_k = 1
        mask_last = False
    else:
        tn = rows                 # multiple of 8 -> valid sublane tiling
        num_k = pl.cdiv(N, tn)
        mask_last = (N % tn) != 0

    kernel = functools.partial(_sum_kernel, n_total=N, tn=tn, mask_last=mask_last)

    return pl.pallas_call(
        kernel,
        out_shape=jax.ShapeDtypeStruct((B, 1, D), x.dtype),
        grid=(B, num_k),
        in_specs=[pl.BlockSpec((1, tn, D), lambda b, k: (b, k, 0))],
        # Same output block for every k -> resident accumulator target.
        out_specs=pl.BlockSpec((1, 1, D), lambda b, k: (b, 0, 0)),
        scratch_shapes=[pltpu.VMEM((1, 1, D), jnp.float32)],
        compiler_params=pltpu.CompilerParams(
            dimension_semantics=("parallel", "arbitrary"),
            vmem_limit_bytes=32 * 1024 * 1024,
        ),
    )(x)


if __name__ == "__main__":
    # Small deterministic example consistent with the forward: [B, N, D]
    key = jax.random.PRNGKey(0)
    B, N, D = 2, 8, 32
    x = jax.random.normal(key, (B, N, D), dtype=jnp.float32)

    out = sum_dim1_keepdim(x)
    out = jax.block_until_ready(out)

    # Correctness check against plain-JAX reference (same semantics as torch).
    ref = jnp.sum(x, axis=1, keepdims=True)
    assert out.shape == (B, 1, D), out.shape
    assert jnp.allclose(out, ref, atol=1e-5, rtol=1e-5)

    # Also exercise the tiled / ragged path (N not a multiple of the tile) at a
    # larger-but-still-small shape to cover the accumulator + masking logic.
    x2 = jax.random.normal(jax.random.PRNGKey(1), (2, 1000, 128), dtype=jnp.bfloat16)
    out2 = jax.block_until_ready(
        sum_dim1_keepdim(x2, target_tile_bytes=128 * 128 * 2)  # force several k-steps
    )
    ref2 = jnp.sum(x2.astype(jnp.float32), axis=1, keepdims=True).astype(jnp.bfloat16)
    assert out2.shape == (2, 1, 128), out2.shape
    assert jnp.allclose(out2.astype(jnp.float32), ref2.astype(jnp.float32), atol=1e-1, rtol=1e-2)

    print("KERNEL_OK")
</pallas_src>

<mosaic_0001>
module attributes {stable_mosaic.version = 11 : i64} {
  func.func @_sum_kernel(%arg0: i32, %arg1: i32, %arg2: memref<1x8x32xf32, #tpu.memory_space<vmem>>, %arg3: memref<1x1x32xf32, #tpu.memory_space<vmem>>, %arg4: memref<1x1x32xf32, #tpu.memory_space<vmem>>) attributes {dimension_semantics = [#tpu.dimension_semantics<parallel>, #tpu.dimension_semantics<arbitrary>], iteration_bounds = array<i64: 2, 1>, scalar_prefetch = 0 : i64, scratch_operands = 1 : i64, tpu.core_type = #tpu.core_type<tc>, window_params = [{transform_indices = @transform_0, window_bounds = array<i64: 1, 8, 32>}, {transform_indices = @transform_1, window_bounds = array<i64: 1, 1, 32>}]} {
    %c0_i32 = arith.constant 0 : i32
    %0 = arith.cmpi eq, %arg1, %c0_i32 : i32
    %1 = arith.extui %0 : i1 to i32
    %c0_i32_0 = arith.constant 0 : i32
    %2 = arith.cmpi ne, %1, %c0_i32_0 : i32
    scf.if %2 {
      %cst_11 = arith.constant 0.000000e+00 : f32
      %12 = vector.broadcast %cst_11 : f32 to vector<1x1x32xf32>
      %c0_12 = arith.constant 0 : index
      %c0_13 = arith.constant 0 : index
      %c0_14 = arith.constant 0 : index
      %13 = vector.load %arg4[%c0_12, %c0_13, %c0_14] : memref<1x1x32xf32, #tpu.memory_space<vmem>>, vector<1x1x32xf32>
      tpu.vector_store %arg4[%c0_12, %c0_13, %c0_14], %12 {strides = array<i32>} : memref<1x1x32xf32, #tpu.memory_space<vmem>>, vector<1x1x32xf32>,
    } else {
    }
    %c0 = arith.constant 0 : index
    %c0_1 = arith.constant 0 : index
    %c0_2 = arith.constant 0 : index
    %3 = vector.load %arg2[%c0, %c0_1, %c0_2] : memref<1x8x32xf32, #tpu.memory_space<vmem>>, vector<1x8x32xf32>
    %c0_3 = arith.constant 0 : index
    %c0_4 = arith.constant 0 : index
    %c0_5 = arith.constant 0 : index
    %4 = vector.load %arg4[%c0_3, %c0_4, %c0_5] : memref<1x1x32xf32, #tpu.memory_space<vmem>>, vector<1x1x32xf32>
    %cst = arith.constant dense<0.000000e+00> : vector<1x32xf32>
    %5 = vector.multi_reduction <add>, %3, %cst [1] : vector<1x8x32xf32> to vector<1x32xf32>
    %6 = vector.shape_cast %5 : vector<1x32xf32> to vector<1x1x32xf32>
    %7 = arith.addf %4, %6 : vector<1x1x32xf32>
    %c0_6 = arith.constant 0 : index
    %c0_7 = arith.constant 0 : index
    %c0_8 = arith.constant 0 : index
    %8 = vector.load %arg4[%c0_6, %c0_7, %c0_8] : memref<1x1x32xf32, #tpu.memory_space<vmem>>, vector<1x1x32xf32>
    tpu.vector_store %arg4[%c0_6, %c0_7, %c0_8], %7 {strides = array<i32>} : memref<1x1x32xf32, #tpu.memory_space<vmem>>, vector<1x1x32xf32>,
    %c0_i32_9 = arith.constant 0 : i32
    %9 = arith.cmpi eq, %arg1, %c0_i32_9 : i32
    %10 = arith.extui %9 : i1 to i32
    %c0_i32_10 = arith.constant 0 : i32
    %11 = arith.cmpi ne, %10, %c0_i32_10 : i32
    scf.if %11 {
      %c0_11 = arith.constant 0 : index
      %c0_12 = arith.constant 0 : index
      %c0_13 = arith.constant 0 : index
      %12 = vector.load %arg4[%c0_11, %c0_12, %c0_13] : memref<1x1x32xf32, #tpu.memory_space<vmem>>, vector<1x1x32xf32>
      %c0_14 = arith.constant 0 : index
      %c0_15 = arith.constant 0 : index
      %c0_16 = arith.constant 0 : index
      %13 = vector.load %arg3[%c0_14, %c0_15, %c0_16] : memref<1x1x32xf32, #tpu.memory_space<vmem>>, vector<1x1x32xf32>
      tpu.vector_store %arg3[%c0_14, %c0_15, %c0_16], %12 {strides = array<i32>} : memref<1x1x32xf32, #tpu.memory_space<vmem>>, vector<1x1x32xf32>,
    } else {
    }
    return
  }
  func.func @transform_0(%arg0: i32, %arg1: i32) -> (i32, i32, i32) {
    %c0_i32 = arith.constant 0 : i32
    %c0_i32_0 = arith.constant 0 : i32
    return %arg0, %arg1, %c0_i32 : i32, i32, i32
  }
  func.func @transform_1(%arg0: i32, %arg1: i32) -> (i32, i32, i32) {
    %c0_i32 = arith.constant 0 : i32
    %c0_i32_0 = arith.constant 0 : i32
    %c0_i32_1 = arith.constant 0 : i32
    return %arg0, %c0_i32, %c0_i32_0 : i32, i32, i32
  }
}

</mosaic_0001>

<llo_original>
// kernel: tpu_custom_call.1
$region0: #{tpu_custom_call.1}
  #allocation0 [shape = 'u32[]', space=smem, size = 0x4, offset = 0x4, fixed_abs, tag = 'smem constant byte address 0x4 - core index']
  #allocation1 [shape = 'u32[144,128]{1,0:T(1,128)}', space=vmem, size = 0x12000, scoped, tag = 'internal scratch']
  #allocation2 [shape = 'f32[1,1,32]{2,1,0:T(1,128)}', space=vmem, size = 0x200, scoped, tag = 'scratch operand']
  %s0 = inlined_call_operand.hbm [shape: f32[2,8,32], index: 0, kind: input, shape index: {}]
  %s1 = inlined_call_operand.hbm [shape: f32[2,1,32], index: 1, kind: output, shape index: {}]
  %s2 = sld [smem:[#allocation0]]
  $region49: #{tpu_custom_call.1} parent=0
    _
  %s4 = ssub.s32 1, %s2
  %s5 = scalar_select 0, %s4, %s2
  $region1: #{tpu_custom_call.1} parent=0
    #allocation3 [shape = 'u8[8192]{0}', space=vmem, size = 0x2000, scoped, tag = 'input window, operand 0']
    #allocation4 [shape = 's32[2]{0}', space=sflag, size = 0x8, scoped, tag = 'scoped memory for tpu_custom_call.1']
    #allocation5 [shape = 's32[2]{0}', space=sflag, size = 0x8, scoped, tag = 'scoped memory for tpu_custom_call.1']
    #allocation6 [shape = 'u8[1024]{0}', space=vmem, size = 0x400, scoped, tag = 'output window, operand 0']
    %6 = vsyncpa [#allocation4], 0
    %s7 = scalar_lea.sflag [#allocation4], 1
    %8 = vsyncpa %s7, 0
    %9 = vsyncpa [#allocation5], 0
    %s10 = scalar_lea.sflag [#allocation5], 1
    %11 = vsyncpa %s10, 0
    loop: start=0, step=1, limit=4
    $region2: #{tpu_custom_call.1} parent=1 // loop_pre_header
      _
    $region3: #{tpu_custom_call.1} parent=1 // loop_header
      %s13 = sphi 0, %s17
      %p14 = scmp.ge.s32.totalorder %s13, 4
      %s20 = sphi 0, %s32
      %s21 = sphi 0, %s28
      %s22 = sphi 0, %s20
      %s23 = sphi 0, %s21
      %s24 = sphi 0, %s22
      %s25 = sphi 0, %s23
      %s37 = sphi 0, %s39
      %s40 = sphi 0, %s37
      %s41 = sphi 0, %s40
      %s57 = sphi 0, %s41
      %s63 = sphi 0, %s65
      %s66 = sphi 0, %s63
      %s67 = sphi 0, %s66
      %s83 = sphi 0, %s67
    $region4: #{tpu_custom_call.1} parent=1 // loop_header_branch
      %16 = sbr.rel (%p14) target = $region8
    $region5: #{tpu_custom_call.1} parent=1 // loop_body
      %s18 = ssub.s32 %s13, 1
      %s19 = ssub.s32 %s13, 2
      %s26 = sadd.s32 1, %s21
      %p27 = scmp.ge.s32.totalorder %s26, 1
      %s28 = scalar_select %p27, 0, %s26
      %s29 = sadd.s32 1, %s20
      %s30 = scalar_select %p27, %s29, %s20
      %p31 = scmp.ge.s32.totalorder %s30, 2
      %s32 = scalar_select %p31, 0, %s30
      %s33 = ssub.s32 %s20, %s32
      %s34 = ssub.s32 %s21, %s28
      %s35 = sor.u32 %s33, %s34
      %p36 = scmp.eq.s32.totalorder %s35, 0
      %s38 = sadd.s32 %s37, 1
      %s39 = scalar_select %p36, %s37, %s38
      %p42 = pneg %p36
      %p43 = scmp.eq.s32.totalorder %s13, 1
      %p44 = por %p42, %p43
      %p45 = scmp.ne.s32.totalorder %s37, %s40
      %p46 = scmp.eq.s32.totalorder %s13, 0
      %p47 = por %p45, %p46
      %p48 = scmp.ne.s32.totalorder %s37, %s40
      %p49 = scmp.eq.s32.totalorder %s18, 1
      %p50 = por %p48, %p49
      %p51 = scmp.ne.s32.totalorder %s40, %s41
      %p52 = scmp.eq.s32.totalorder %s18, 0
      %p53 = por %p51, %p52
      %p54 = scmp.ne.s32.totalorder %s40, %s41
      %p55 = scmp.eq.s32.totalorder %s19, 1
      %p56 = por %p54, %p55
      %p58 = scmp.ne.s32.totalorder %s41, %s57
      %p59 = scmp.eq.s32.totalorder %s19, 0
      %p60 = por %p58, %p59
      %s61 = ssub.s32 %s20, %s32
      %p62 = scmp.eq.s32.totalorder %s61, 0
      %s64 = sadd.s32 %s63, 1
      %s65 = scalar_select %p62, %s63, %s64
      %p68 = pneg %p62
      %p69 = scmp.eq.s32.totalorder %s13, 1
      %p70 = por %p68, %p69
      %p71 = scmp.ne.s32.totalorder %s63, %s66
      %p72 = scmp.eq.s32.totalorder %s13, 0
      %p73 = por %p71, %p72
      %p74 = scmp.ne.s32.totalorder %s63, %s66
      %p75 = scmp.eq.s32.totalorder %s18, 1
      %p76 = por %p74, %p75
      %p77 = scmp.ne.s32.totalorder %s66, %s67
      %p78 = scmp.eq.s32.totalorder %s18, 0
      %p79 = por %p77, %p78
      %p80 = scmp.ne.s32.totalorder %s66, %s67
      %p81 = scmp.eq.s32.totalorder %s19, 1
      %p82 = por %p80, %p81
      %p84 = scmp.ne.s32.totalorder %s67, %s83
      %p85 = scmp.eq.s32.totalorder %s19, 0
      %p86 = por %p84, %p85
      %p87 = scmp.le.s32.totalorder 1, %s13
      %p88 = scmp.lt.s32.totalorder %s13, 3
      %p89 = pnand %p87, %p88
      %p90 = pneg %p89
      // Predicated region
      $region9: #{tpu_custom_call.1} parent=5 // pred_check
        _
      $region10: #{tpu_custom_call.1} parent=5 // pred_check_branch
        %92 = sbr.rel (%p89) target = $region12
      $region11: #{tpu_custom_call.1} parent=5 // pred_region
        %s93 = ssub.s32 %s13, 1
      $region12: #{tpu_custom_call.1} parent=5 // pred_fallthru
        _
      %p94 = scmp.lt.s32.totalorder %s13, 2
      // Predicated region
      $region13: #{tpu_custom_call.1} parent=5 // pred_check
        %p95 = pneg %p94
      $region14: #{tpu_custom_call.1} parent=5 // pred_check_branch
        %97 = sbr.rel (%p95) target = $region16
      $region15: #{tpu_custom_call.1} parent=5 // pred_region
        // Predicated region
        $region17: #{tpu_custom_call.1} parent=15 // pred_check
          %p98 = pneg %p47
        $region18: #{tpu_custom_call.1} parent=15 // pred_check_branch
          %100 = sbr.rel (%p98) target = $region20
        $region19: #{tpu_custom_call.1} parent=15 // pred_region
          %s101 = sand.u32 %s37, 1
          %s102 = scalar_lea.sflag [#allocation4], %s101
          %s103 = sand.u32 %s37, 1
          %s104 = smul.addr %s103, 8
          %s105 = scalar_lea.vmem [#allocation3], %s104
          %s107 = ssub.s32 128, 128
          %108 = vsyncadd %s102, %s107
          %s109 = sadd.s32 %s21, %s20
          %s110 = smul.addr %s109, 128
          %s111 = scalar_lea.hbm %s0, %s110
          %s113 = sshll.u32 %s105, 4
          %s114 = int_to_ptr.vmem [resolvable:$true] %s113
          %116 = dma.hbm_to_vmem [thread:$0]  %s111, 128, %s114, %s102
        $region20: #{tpu_custom_call.1} parent=15 // pred_fallthru
          _
      $region16: #{tpu_custom_call.1} parent=5 // pred_fallthru
        _
      %p117 = scmp.le.s32.totalorder 1, %s13
      %p118 = scmp.lt.s32.totalorder %s13, 3
      %p119 = pnand %p117, %p118
      %p120 = pneg %p119
      // Predicated region
      $region21: #{tpu_custom_call.1} parent=5 // pred_check
        _
      $region22: #{tpu_custom_call.1} parent=5 // pred_check_branch
        %122 = sbr.rel (%p119) target = $region24
      $region23: #{tpu_custom_call.1} parent=5 // pred_region
        %s123 = ssub.s32 %s13, 1
        %s124 = sand.u32 %s40, 1
        %s125 = scalar_lea.sflag [#allocation4], %s124
        %s126 = sand.u32 %s40, 1
        %s127 = smul.addr %s126, 8
        %s128 = scalar_lea.vmem [#allocation3], %s127
        // Predicated region
        $region25: #{tpu_custom_call.1} parent=23 // pred_check
          %p129 = pneg %p53
        $region26: #{tpu_custom_call.1} parent=23 // pred_check_branch
          %131 = sbr.rel (%p129) target = $region28
        $region27: #{tpu_custom_call.1} parent=23 // pred_region
          %132 = dma.done %s125, 128
        $region28: #{tpu_custom_call.1} parent=23 // pred_fallthru
          _
        %s133 = sand.u32 %s40, 1
        %s134 = scalar_lea.sflag [#allocation4], %s133
        %s135 = sand.u32 %s40, 1
        %s136 = smul.addr %s135, 8
        %s137 = scalar_lea.vmem [#allocation3], %s136
        %p138 = pneg %p53
        %p139 = pneg %p50
        %p140 = pneg %p79
        %p141 = pneg %p76
        %s142 = sand.u32 %s66, 1
        %s143 = scalar_lea.sflag [#allocation5], %s142
        %s144 = sand.u32 %s66, 1
        %s145 = scalar_lea.vmem [#allocation6], %s144
        %p146 = scmp.eq.s32.totalorder %s23, 0
        // Predicated region
        $region29: #{tpu_custom_call.1} parent=23 // pred_check
          %p147 = pneg %p146
        $region30: #{tpu_custom_call.1} parent=23 // pred_check_branch
          %149 = sbr.rel (%p147) target = $region32
        $region31: #{tpu_custom_call.1} parent=23 // pred_region
          %vm150 = vcmask 253952
          %151 = vst.msk [vmem:[#allocation2] sm:$0x1] %vm150, 0.0
        $region32: #{tpu_custom_call.1} parent=23 // pred_fallthru
          _
        %v152 = vld [vmem:[%s128] sm:$0xff]
        %v153 = vld [vmem:[#allocation2] sm:$0x1]
        %vm154 = vcmask 261120
        %v155 = vsel %vm154, %v152, 0.0
        %v156 = vrot.slane %v155, 4
        %v157 = vadd.f32 %v155, %v156
        %v158 = vrot.slane %v157, 2
        %v159 = vadd.f32 %v157, %v158
        %v160 = vrot.slane %v159, 1
        %v161 = vadd.f32 %v159, %v160
        %v162 = vadd.f32 %v153, %v161
        %vm163 = vcmask 253952
        %164 = vst.msk [vmem:[#allocation2] sm:$0x1] %vm163, %v162
        // Predicated region
        $region33: #{tpu_custom_call.1} parent=23 // pred_check
          %p165 = pneg %p146
        $region34: #{tpu_custom_call.1} parent=23 // pred_check_branch
          %167 = sbr.rel (%p165) target = $region36
        $region35: #{tpu_custom_call.1} parent=23 // pred_region
          %v168 = vld [vmem:[#allocation2] sm:$0x1]
          %169 = vst.msk [vmem:[%s145] sm:$0x1] %vm163, %v168
        $region36: #{tpu_custom_call.1} parent=23 // pred_fallthru
          _
        %s170 = sand.u32 %s66, 1
        %s171 = scalar_lea.sflag [#allocation5], %s170
        %s172 = sand.u32 %s66, 1
        %s173 = scalar_lea.vmem [#allocation6], %s172
        // Predicated region
        $region37: #{tpu_custom_call.1} parent=23 // pred_check
          %p174 = pneg %p76
        $region38: #{tpu_custom_call.1} parent=23 // pred_check_branch
          %176 = sbr.rel (%p174) target = $region40
        $region39: #{tpu_custom_call.1} parent=23 // pred_region
          %s178 = ssub.s32 16, 16
          %179 = vsyncadd %s171, %s178
          %s180 = smul.addr %s22, 16
          %s181 = scalar_lea.hbm %s1, %s180
          %s183 = sshll.u32 %s173, 4
          %s184 = int_to_ptr.vmem [resolvable:$true] %s183
          %186 = dma.vmem_to_hbm [thread:$0]  %s184, 16, %s181, %s171
        $region40: #{tpu_custom_call.1} parent=23 // pred_fallthru
          _
      $region24: #{tpu_custom_call.1} parent=5 // pred_fallthru
        _
      %p187 = scmp.le.s32.totalorder 2, %s13
      // Predicated region
      $region41: #{tpu_custom_call.1} parent=5 // pred_check
        %p188 = pneg %p187
      $region42: #{tpu_custom_call.1} parent=5 // pred_check_branch
        %190 = sbr.rel (%p188) target = $region44
      $region43: #{tpu_custom_call.1} parent=5 // pred_region
        %s191 = ssub.s32 %s13, 2
        // Predicated region
        $region45: #{tpu_custom_call.1} parent=43 // pred_check
          %p192 = pneg %p82
        $region46: #{tpu_custom_call.1} parent=43 // pred_check_branch
          %194 = sbr.rel (%p192) target = $region48
        $region47: #{tpu_custom_call.1} parent=43 // pred_region
          %s195 = sand.u32 %s67, 1
          %s196 = scalar_lea.sflag [#allocation5], %s195
          %s197 = sand.u32 %s67, 1
          %s198 = scalar_lea.vmem [#allocation6], %s197
          %199 = dma.done %s196, 16
        $region48: #{tpu_custom_call.1} parent=43 // pred_fallthru
          _
      $region44: #{tpu_custom_call.1} parent=5 // pred_fallthru
        _
    $region6: #{tpu_custom_call.1} parent=1 // loop_footer
      %s17 = sadd.s32 1, %s13
    $region7: #{tpu_custom_call.1} parent=1 // loop_footer_branch
      %12 = sbr.rel target = $region3
    $region8: #{tpu_custom_call.1} parent=1 // loop_exit
      _
    %200 = vsyncpa [#allocation4], 1
    %s201 = scalar_lea.sflag [#allocation4], 1
    %202 = vsyncpa %s201, 1
    %203 = vsyncpa [#allocation5], 1
    %s204 = scalar_lea.sflag [#allocation5], 1
    %205 = vsyncpa %s204, 1

</llo_original>
